<compile_context>
chip_gen: v7x
topology: tpu7x:2x2x1
jax: 0.10.0
libtpu: 0.0.40
codegen_flags: <defaults>
</compile_context>

<pallas_src>
import jax
import jax.numpy as jnp
from jax.experimental import pallas as pl
from jax.experimental.pallas import tpu as pltpu


VOC_SIZE = 64    # vocabulary size (multiple of 8 -> sublane friendly)
EMB_SIZE = 128   # embedding dim (multiple of 128 -> lane aligned)
TB = 2048        # tokens per grid step (~1 MiB f32 output tile)


def _round_up(x, m):
    return ((x + m - 1) // m) * m


def embedding_kernel(ids_ref, table_ref, out_ref):
    # ids_ref  : VMEM (1, TB) int32   -- lane-dense token ids for this block
    # table_ref: VMEM (V, D) float32  -- full embedding table (resident)
    # out_ref  : VMEM (TB, D)         -- lane-dense output tile
    v, _ = table_ref.shape
    tb = ids_ref.shape[1]

    ids_row = ids_ref[...]                                        # (1, TB)
    row_iota = jax.lax.broadcasted_iota(jnp.int32, (v, tb), 0)    # (V, TB)
    # Transposed one-hot: onehot_t[r, t] = (r == ids[t]).
    onehot_t = (row_iota == ids_row).astype(table_ref.dtype)      # (V, TB)

    # Gather via MXU: out = onehot_t^T @ table, contracting the vocab dim of
    # both operands.  HIGHEST precision keeps the selected f32 rows exact.
    out = jax.lax.dot_general(
        onehot_t,
        table_ref[...],
        dimension_numbers=(((0,), (0,)), ((), ())),               # -> (TB, D)
        preferred_element_type=jnp.float32,
        precision=jax.lax.Precision.HIGHEST,
    )
    out_ref[...] = out.astype(out_ref.dtype)


def embedding_forward(ids, table, *, tb=TB, out_dtype=None):
    """ids: (B, S) int32, table: (V, D) float32 -> (B, S, D)."""
    B, S = ids.shape
    V, D = table.shape
    N = B * S
    out_dtype = table.dtype if out_dtype is None else out_dtype

    # Clamp the token block to ~N (no point in a block much larger than the
    # input); keep it a multiple of 8 so the output block stays sublane-legal.
    tb_eff = max(8, min(tb, _round_up(N, 8)))
    n_blocks = pl.cdiv(N, tb_eff)
    n_pad = n_blocks * tb_eff

    # Only the tiny int32 ids array is padded; the (N, D) output is never
    # padded or sliced (a ragged last block is write-masked by Pallas).
    ids_flat = ids.reshape(N).astype(jnp.int32)
    if n_pad != N:
        ids_flat = jnp.pad(ids_flat, (0, n_pad - N))
    ids_lanes = ids_flat.reshape(n_blocks, tb_eff)   # lane-dense per block

    passes = 6  # Precision.HIGHEST f32 emulation on the bf16 MXU
    cost = pl.CostEstimate(
        flops=2 * n_pad * V * D * passes,
        transcendentals=0,
        bytes_accessed=N * D * table.dtype.itemsize + V * D * table.dtype.itemsize + n_pad * 4,
    )

    out_flat = pl.pallas_call(
        embedding_kernel,
        out_shape=jax.ShapeDtypeStruct((N, D), out_dtype),
        grid_spec=pltpu.PrefetchScalarGridSpec(
            num_scalar_prefetch=0,
            grid=(n_blocks,),
            in_specs=[
                # per-block lane-dense token ids (one contiguous row burst)
                pl.BlockSpec((1, tb_eff), lambda i: (i, 0)),
                # full embedding table, constant index_map -> fetched once
                pl.BlockSpec((V, D), lambda i: (0, 0)),
            ],
            out_specs=pl.BlockSpec((tb_eff, D), lambda i: (i, 0)),
        ),
        compiler_params=pltpu.CompilerParams(
            # Token blocks are independent -> shard across TensorCores.
            dimension_semantics=("parallel",),
        ),
        cost_estimate=cost,
    )(ids_lanes, table)

    return out_flat.reshape(B, S, D)


if __name__ == "__main__":
    key = jax.random.PRNGKey(0)
    k_ids, k_w = jax.random.split(key)

    B, S = 2, 8
    # nn.Embedding default init is N(0, 1).
    table = jax.random.normal(k_w, (VOC_SIZE, EMB_SIZE), dtype=jnp.float32)
    ids = jax.random.randint(k_ids, (B, S), 0, VOC_SIZE, dtype=jnp.int32)

    out = embedding_forward(ids, table)
    out = jax.block_until_ready(out)

    # Reference check (plain JAX gather == nn.Embedding forward).
    ref = jnp.take(table, ids, axis=0)
    assert out.shape == (B, S, EMB_SIZE)
    assert out.dtype == table.dtype
    # Wrong-row errors would be O(1); HIGHEST one-hot matmul is bit-accurate,
    # tolerance only guards against ulp-level drift in the emulation.
    assert jnp.allclose(out, ref, rtol=1e-6, atol=1e-6), "embedding mismatch"

    print("KERNEL_OK")
</pallas_src>

<mosaic_0001>
module attributes {stable_mosaic.version = 11 : i64} {
  func.func @embedding_kernel(%arg0: i32, %arg1: memref<1x16xi32, #tpu.memory_space<vmem>>, %arg2: memref<64x128xf32, #tpu.memory_space<vmem>>, %arg3: memref<16x128xf32, #tpu.memory_space<vmem>>) attributes {dimension_semantics = [#tpu.dimension_semantics<parallel>], iteration_bounds = array<i64: 1>, scalar_prefetch = 0 : i64, scratch_operands = 0 : i64, tpu.core_type = #tpu.core_type<tc>, window_params = [{transform_indices = @transform_0, window_bounds = array<i64: 1, 16>}, {pipeline_mode = #tpu.pipeline_mode<synchronous>, transform_indices = @transform_1, window_bounds = array<i64: 64, 128>}, {transform_indices = @transform_2, window_bounds = array<i64: 16, 128>}]} {
    %c0 = arith.constant 0 : index
    %c0_0 = arith.constant 0 : index
    %0 = vector.load %arg1[%c0, %c0_0] : memref<1x16xi32, #tpu.memory_space<vmem>>, vector<1x16xi32>
    %1 = tpu.iota {dimensions = array<i32: 0>} : vector<64x16xi32>
    %2 = vector.broadcast %0 : vector<1x16xi32> to vector<64x16xi32>
    %3 = arith.cmpi eq, %1, %2 : vector<64x16xi32>
    %4 = arith.extui %3 : vector<64x16xi1> to vector<64x16xi32>
    %5 = arith.sitofp %4 : vector<64x16xi32> to vector<64x16xf32>
    %c0_1 = arith.constant 0 : index
    %c0_2 = arith.constant 0 : index
    %6 = vector.load %arg2[%c0_1, %c0_2] : memref<64x128xf32, #tpu.memory_space<vmem>>, vector<64x128xf32>
    %cst = arith.constant dense<0.000000e+00> : vector<16x128xf32>
    %7 = tpu.matmul %5, %6, %cst {dimension_numbers = #tpu.dot_dimension_numbers<[0], [0], [1], [1], [0, 1, 1, 1], [], []>, precision = #tpu.contract_precision<fp32>} : vector<64x16xf32>, vector<64x128xf32>, vector<16x128xf32> -> vector<16x128xf32>
    %c0_3 = arith.constant 0 : index
    %c0_4 = arith.constant 0 : index
    %8 = vector.load %arg3[%c0_3, %c0_4] : memref<16x128xf32, #tpu.memory_space<vmem>>, vector<16x128xf32>
    tpu.vector_store %arg3[%c0_3, %c0_4], %7 {strides = array<i32>} : memref<16x128xf32, #tpu.memory_space<vmem>>, vector<16x128xf32>,
    return
  }
  func.func @transform_0(%arg0: i32) -> (i32, i32) {
    %c0_i32 = arith.constant 0 : i32
    %c0_i32_0 = arith.constant 0 : i32
    return %arg0, %c0_i32 : i32, i32
  }
  func.func @transform_1(%arg0: i32) -> (i32, i32) {
    %c0_i32 = arith.constant 0 : i32
    %c0_i32_0 = arith.constant 0 : i32
    %c0_i32_1 = arith.constant 0 : i32
    return %c0_i32, %c0_i32_0 : i32, i32
  }
  func.func @transform_2(%arg0: i32) -> (i32, i32) {
    %c0_i32 = arith.constant 0 : i32
    %c0_i32_0 = arith.constant 0 : i32
    return %arg0, %c0_i32 : i32, i32
  }
}

</mosaic_0001>

<llo_original>
// kernel: tpu_custom_call.1
$region0: #{tpu_custom_call.1}
  #allocation0 [shape = 'u32[]', space=smem, size = 0x4, offset = 0x4, fixed_abs, tag = 'smem constant byte address 0x4 - core index']
  #allocation1 [shape = 'u32[144,128]{1,0:T(1,128)}', space=vmem, size = 0x12000, scoped, tag = 'internal scratch']
  %s0 = inlined_call_operand.hbm [shape: s32[1,16], index: 0, kind: input, shape index: {}]
  %s1 = inlined_call_operand.hbm [shape: f32[64,128], index: 1, kind: input, shape index: {}]
  %s2 = inlined_call_operand.hbm [shape: f32[16,128], index: 2, kind: output, shape index: {}]
  %s3 = sld [smem:[#allocation0]]
  $region26: #{tpu_custom_call.1} parent=0
    _
  %s5 = ssub.s32 1, %s3
  %s6 = scalar_select 0, %s5, %s3
  $region1: #{tpu_custom_call.1} parent=0
    #allocation2 [shape = 'u8[512]{0}', space=vmem, size = 0x400, scoped, tag = 'input window, operand 0, single buffered']
    #allocation3 [shape = 's32[1]{0}', space=sflag, size = 0x4, scoped, tag = 'scoped memory for tpu_custom_call.1']
    #allocation4 [shape = 's32[1]{0}', space=sflag, size = 0x4, scoped, tag = 'scoped memory for tpu_custom_call.1']
    #allocation5 [shape = 'u8[32768]{0}', space=vmem, size = 0x8000, scoped, tag = 'input window, operand 1, single buffered']
    #allocation6 [shape = 's32[1]{0}', space=sflag, size = 0x4, scoped, tag = 'scoped memory for tpu_custom_call.1']
    #allocation7 [shape = 'u8[8192]{0}', space=vmem, size = 0x2000, scoped, tag = 'output window, operand 0, single buffered']
    %7 = vsyncpa [#allocation3], 0
    %8 = vsyncpa [#allocation6], 0
    %9 = vsyncpa [#allocation4], 0
    // Predicated region
    $region2: #{tpu_custom_call.1} parent=1 // pred_check
      _
    $region3: #{tpu_custom_call.1} parent=1 // pred_check_branch
      %11 = sbr.rel (0) target = $region5
    $region4: #{tpu_custom_call.1} parent=1 // pred_region
      %s13 = ssub.s32 16, 16
      %14 = vsyncadd [#allocation3], %s13
      %s16 = sshll.u32 [#allocation2], 4
      %s17 = int_to_ptr.vmem [resolvable:$true] %s16
      %19 = dma.hbm_to_vmem [thread:$0]  %s0, 16, %s17, [#allocation3]
    $region5: #{tpu_custom_call.1} parent=1 // pred_fallthru
      _
    // Predicated region
    $region6: #{tpu_custom_call.1} parent=1 // pred_check
      _
    $region7: #{tpu_custom_call.1} parent=1 // pred_check_branch
      %21 = sbr.rel (0) target = $region9
    $region8: #{tpu_custom_call.1} parent=1 // pred_region
      %s23 = ssub.s32 1024, 1024
      %24 = vsyncadd [#allocation6], %s23
      %s25 = sshll.u32 [#allocation5], 4
      %s26 = int_to_ptr.vmem [resolvable:$true] %s25
      %31 = dma.hbm_to_vmem [thread:$0]  %s1, 1024, %s26, [#allocation6], 128, 128, 8
    $region9: #{tpu_custom_call.1} parent=1 // pred_fallthru
      _
    // Predicated region
    $region10: #{tpu_custom_call.1} parent=1 // pred_check
      _
    $region11: #{tpu_custom_call.1} parent=1 // pred_check_branch
      %33 = sbr.rel (0) target = $region13
    $region12: #{tpu_custom_call.1} parent=1 // pred_region
      %34 = dma.done [#allocation3], 16
    $region13: #{tpu_custom_call.1} parent=1 // pred_fallthru
      _
    // Predicated region
    $region14: #{tpu_custom_call.1} parent=1 // pred_check
      _
    $region15: #{tpu_custom_call.1} parent=1 // pred_check_branch
      %36 = sbr.rel (0) target = $region17
    $region16: #{tpu_custom_call.1} parent=1 // pred_region
      %37 = dma.done [#allocation6], 1024
    $region17: #{tpu_custom_call.1} parent=1 // pred_fallthru
      _
    %v38 = vld [vmem:[#allocation2] sm:$0x1]
    %v39 = vlaneseq
    %v40 = vshrl.u32 %v39, 7
    %v41 = vadd.s32 %v40, 8
    %v42 = vadd.s32 %v40, 16
    %v43 = vadd.s32 %v40, 24
    %v44 = vadd.s32 %v40, 32
    %v45 = vadd.s32 %v40, 40
    %v46 = vadd.s32 %v40, 48
    %v47 = vadd.s32 %v40, 56
    %v48 = vlaneseq
    %v49 = vshrl.u32 %v48, 7
    %v50 = vsub.s32 0, %v49
    %v51 = vrot.slane %v38, %v50
    %vm52 = vcmp.eq.s32.totalorder %v40, %v51
    %vm53 = vcmp.eq.s32.totalorder %v41, %v51
    %vm54 = vcmp.eq.s32.totalorder %v42, %v51
    %vm55 = vcmp.eq.s32.totalorder %v43, %v51
    %vm56 = vcmp.eq.s32.totalorder %v44, %v51
    %vm57 = vcmp.eq.s32.totalorder %v45, %v51
    %vm58 = vcmp.eq.s32.totalorder %v46, %v51
    %vm59 = vcmp.eq.s32.totalorder %v47, %v51
    %v60 = vsel %vm52, 1, 0
    %v61 = vsel %vm53, 1, 0
    %v62 = vsel %vm54, 1, 0
    %v63 = vsel %vm55, 1, 0
    %v64 = vsel %vm56, 1, 0
    %v65 = vsel %vm57, 1, 0
    %v66 = vsel %vm58, 1, 0
    %v67 = vsel %vm59, 1, 0
    %v68 = vcvt.s32.f32 %v60
    %v69 = vcvt.s32.f32 %v61
    %v70 = vcvt.s32.f32 %v62
    %v71 = vcvt.s32.f32 %v63
    %v72 = vcvt.s32.f32 %v64
    %v73 = vcvt.s32.f32 %v65
    %v74 = vcvt.s32.f32 %v66
    %v75 = vcvt.s32.f32 %v67
    %v76 = vld [vmem:[#allocation5] sm:$0xff]
    %v77 = vld [vmem:[#allocation5 + $0x8] sm:$0xff]
    %v78 = vld [vmem:[#allocation5 + $0x10] sm:$0xff]
    %v79 = vld [vmem:[#allocation5 + $0x18] sm:$0xff]
    %v80 = vld [vmem:[#allocation5 + $0x20] sm:$0xff]
    %v81 = vld [vmem:[#allocation5 + $0x28] sm:$0xff]
    %v82 = vld [vmem:[#allocation5 + $0x30] sm:$0xff]
    %v83 = vld [vmem:[#allocation5 + $0x38] sm:$0xff]
    %84 = vxpose.xlu0.b32.start [1/16] %v68, 128
    %85 = vxpose.xlu0.b32.cont [2/16] %v69, 128
    %86 = vxpose.xlu0.b32.cont [3/16] %v70, 128
    %87 = vxpose.xlu0.b32.cont [4/16] %v71, 128
    %88 = vxpose.xlu0.b32.cont [5/16] %v72, 128
    %89 = vxpose.xlu0.b32.cont [6/16] %v73, 128
    %90 = vxpose.xlu0.b32.cont [7/16] %v74, 128
    %91 = vxpose.xlu0.b32.cont [8/16] %v75, 128
    %92 = vxpose.xlu0.b32.cont [9/16] 0.0, 128
    %93 = vxpose.xlu0.b32.cont [10/16] 0.0, 128
    %94 = vxpose.xlu0.b32.cont [11/16] 0.0, 128
    %95 = vxpose.xlu0.b32.cont [12/16] 0.0, 128
    %96 = vxpose.xlu0.b32.cont [13/16] 0.0, 128
    %97 = vxpose.xlu0.b32.cont [14/16] 0.0, 128
    %98 = vxpose.xlu0.b32.cont [15/16] 0.0, 128
    %99 = vxpose.xlu0.b32.end [16/16] 0.0, 128
    %v100 = vpop.trf.xlu0
    %v101 = vpop.trf.xlu0
    %v102 = vpop.trf.xlu0
    %v103 = vpop.trf.xlu0
    %v104 = vpop.trf.xlu0
    %v105 = vpop.trf.xlu0
    %v106 = vpop.trf.xlu0
    %v107 = vpop.trf.xlu0
    %v108 = vpop.trf.xlu0
    %v109 = vpop.trf.xlu0
    %v110 = vpop.trf.xlu0
    %v111 = vpop.trf.xlu0
    %v112 = vpop.trf.xlu0
    %v113 = vpop.trf.xlu0
    %v114 = vpop.trf.xlu0
    %v115 = vpop.trf.xlu0
    %vm116 = vcmask 523264
    %v118 = vsel %vm116, %v100, 0
    %v121 = vsel %vm116, %v101, 0
    %123 = vmatprep.subr.mxu0 0.0
    %v124 = vand.u32 %v76, 4294901760
    %125 = vmatpush1.msra.mxu0 %v124
    %126 = vmatprep.subr.mxu0 0.0
    %v127 = vand.u32 %v77, 4294901760
    %128 = vmatpush1.msra.mxu0 %v127
    %129 = vmatprep.subr.mxu0 0.0
    %v130 = vand.u32 %v78, 4294901760
    %131 = vmatpush1.msra.mxu0 %v130
    %132 = vmatprep.subr.mxu0 0.0
    %v133 = vand.u32 %v79, 4294901760
    %134 = vmatpush1.msra.mxu0 %v133
    %135 = vmatprep.subr.mxu0 0.0
    %v136 = vand.u32 %v80, 4294901760
    %137 = vmatpush1.msra.mxu0 %v136
    %138 = vmatprep.subr.mxu0 0.0
    %v139 = vand.u32 %v81, 4294901760
    %140 = vmatpush1.msra.mxu0 %v139
    %141 = vmatprep.subr.mxu0 0.0
    %v142 = vand.u32 %v82, 4294901760
    %143 = vmatpush1.msra.mxu0 %v142
    %144 = vmatprep.subr.mxu0 0.0
    %v145 = vand.u32 %v83, 4294901760
    %146 = vmatpush1.msra.mxu0 %v145
    %147 = vmatprep.subr.mxu0 0.0
    %148 = vmatpush1.msra.mxu0 0.0
    %149 = vmatprep.subr.mxu0 0.0
    %150 = vmatpush1.msra.mxu0 0.0
    %151 = vmatprep.subr.mxu0 0.0
    %152 = vmatpush1.msra.mxu0 0.0
    %153 = vmatprep.subr.mxu0 0.0
    %154 = vmatpush1.msra.mxu0 0.0
    %155 = vmatprep.subr.mxu0 0.0
    %156 = vmatpush1.msra.mxu0 0.0
    %157 = vmatprep.subr.mxu0 0.0
    %158 = vmatpush1.msra.mxu0 0.0
    %159 = vmatprep.subr.mxu0 0.0
    %160 = vmatpush1.msra.mxu0 0.0
    %161 = vmatprep.subr.mxu0 0.0
    %162 = vmatpush1.msra.mxu0 0.0
    %163 = vmatprep.subr.mxu0 0.0
    %164 = vmatpush1.msra.mxu0 0.0
    %165 = vmatprep.subr.mxu0 0.0
    %166 = vmatpush1.msra.mxu0 0.0
    %167 = vmatprep.subr.mxu0 0.0
    %168 = vmatpush1.msra.mxu0 0.0
    %169 = vmatprep.subr.mxu0 0.0
    %170 = vmatpush1.msra.mxu0 0.0
    %171 = vmatprep.subr.mxu0 0.0
    %172 = vmatpush1.msra.mxu0 0.0
    %173 = vmatprep.subr.mxu0 0.0
    %174 = vmatpush1.msra.mxu0 0.0
    %175 = vmatprep.subr.mxu0 0.0
    %176 = vmatpush1.msra.mxu0 0.0
    %177 = vmatprep.subr.mxu0 0.0
    %178 = vmatpush1.msra.mxu0 0.0
    %179 = vmatprep.subr.mxu0 0.0
    %180 = vmatpush1.msra.mxu0 0.0
    %181 = vmatprep.subr.mxu0 0.0
    %182 = vmatpush1.msra.mxu0 0.0
    %183 = vmatprep.subr.mxu0 0.0
    %184 = vmatpush1.msra.mxu0 0.0
    %185 = vmatprep.subr.mxu0 0.0
    %186 = vmatpush1.msra.mxu0 0.0
    %187 = vmatprep.subr.mxu0 0.0
    %188 = vmatpush1.msra.mxu0 0.0
    %189 = vmatprep.subr.mxu0 0.0
    %190 = vmatpush1.msra.mxu0 0.0
    %191 = vmatprep.subr.mxu0 0.0
    %192 = vmatpush1.msra.mxu0 0.0
    %193 = vmatprep.subr.mxu0 0.0
    %194 = vmatpush1.msra.mxu0 0.0
    %195 = vmatprep.mubr.f32.mxu0 0.0
    %v196 = vand.u32 %v118, 4294901760
    %v197 = vsub.f32 %v118, %v196
    %v198 = vand.u32 %v197, 4294901760
    %v199 = vsub.f32 %v197, %v198
    %v200 = vand.u32 %v199, 4294901760
    %201 = vmatmul.mubr.f32.gmra.mrb[0].mxu0 %v200
    %v202 = vpop.f32.mrb[0].mxu0
    %v203 = vadd.f32 0.0, %v202
    %v204 = vpop.f32.mrb[0].mxu0
    %205 = vmatprep.mubr.f32.mxu0 0.0
    %v206 = vand.u32 %v121, 4294901760
    %v207 = vsub.f32 %v121, %v206
    %v208 = vand.u32 %v207, 4294901760
    %v209 = vsub.f32 %v207, %v208
    %v210 = vand.u32 %v209, 4294901760
    %211 = vmatmul.mubr.f32.gmra.mrb[0].mxu0 %v210
    %v212 = vpop.f32.mrb[0].mxu0
    %v213 = vadd.f32 0.0, %v212
    %v214 = vpop.f32.mrb[0].mxu0
    %215 = vdwg.mxu0
    %216 = vmatprep.subr.mxu0 0.0
    %v217 = vand.u32 %v76, 4294901760
    %v218 = vsub.f32 %v76, %v217
    %v219 = vand.u32 %v218, 4294901760
    %v220 = vsub.f32 %v218, %v219
    %v221 = vand.u32 %v220, 4294901760
    %222 = vmatpush1.msra.mxu0 %v221
    %223 = vmatprep.subr.mxu0 0.0
    %v224 = vand.u32 %v77, 4294901760
    %v225 = vsub.f32 %v77, %v224
    %v226 = vand.u32 %v225, 4294901760
    %v227 = vsub.f32 %v225, %v226
    %v228 = vand.u32 %v227, 4294901760
    %229 = vmatpush1.msra.mxu0 %v228
    %230 = vmatprep.subr.mxu0 0.0
    %v231 = vand.u32 %v78, 4294901760
    %v232 = vsub.f32 %v78, %v231
    %v233 = vand.u32 %v232, 4294901760
    %v234 = vsub.f32 %v232, %v233
    %v235 = vand.u32 %v234, 4294901760
    %236 = vmatpush1.msra.mxu0 %v235
    %237 = vmatprep.subr.mxu0 0.0
    %v238 = vand.u32 %v79, 4294901760
    %v239 = vsub.f32 %v79, %v238
    %v240 = vand.u32 %v239, 4294901760
    %v241 = vsub.f32 %v239, %v240
    %v242 = vand.u32 %v241, 4294901760
    %243 = vmatpush1.msra.mxu0 %v242
    %244 = vmatprep.subr.mxu0 0.0
    %v245 = vand.u32 %v80, 4294901760
    %v246 = vsub.f32 %v80, %v245
    %v247 = vand.u32 %v246, 4294901760
    %v248 = vsub.f32 %v246, %v247
    %v249 = vand.u32 %v248, 4294901760
    %250 = vmatpush1.msra.mxu0 %v249
    %251 = vmatprep.subr.mxu0 0.0
    %v252 = vand.u32 %v81, 4294901760
    %v253 = vsub.f32 %v81, %v252
    %v254 = vand.u32 %v253, 4294901760
    %v255 = vsub.f32 %v253, %v254
    %v256 = vand.u32 %v255, 4294901760
    %257 = vmatpush1.msra.mxu0 %v256
    %258 = vmatprep.subr.mxu0 0.0
    %v259 = vand.u32 %v82, 4294901760
    %v260 = vsub.f32 %v82, %v259
    %v261 = vand.u32 %v260, 4294901760
    %v262 = vsub.f32 %v260, %v261
    %v263 = vand.u32 %v262, 4294901760
    %264 = vmatpush1.msra.mxu0 %v263
    %265 = vmatprep.subr.mxu0 0.0
    %v266 = vand.u32 %v83, 4294901760
    %v267 = vsub.f32 %v83, %v266
    %v268 = vand.u32 %v267, 4294901760
    %v269 = vsub.f32 %v267, %v268
    %v270 = vand.u32 %v269, 4294901760
    %271 = vmatpush1.msra.mxu0 %v270
    %272 = vmatprep.subr.mxu0 0.0
    %273 = vmatpush1.msra.mxu0 0.0
    %274 = vmatprep.subr.mxu0 0.0
    %275 = vmatpush1.msra.mxu0 0.0
    %276 = vmatprep.subr.mxu0 0.0
    %277 = vmatpush1.msra.mxu0 0.0
    %278 = vmatprep.subr.mxu0 0.0
    %279 = vmatpush1.msra.mxu0 0.0
    %280 = vmatprep.subr.mxu0 0.0
    %281 = vmatpush1.msra.mxu0 0.0
    %282 = vmatprep.subr.mxu0 0.0
    %283 = vmatpush1.msra.mxu0 0.0
    %284 = vmatprep.subr.mxu0 0.0
    %285 = vmatpush1.msra.mxu0 0.0
    %286 = vmatprep.subr.mxu0 0.0
    %287 = vmatpush1.msra.mxu0 0.0
    %288 = vmatprep.subr.mxu0 0.0
    %289 = vmatpush1.msra.mxu0 0.0
    %290 = vmatprep.subr.mxu0 0.0
    %291 = vmatpush1.msra.mxu0 0.0
    %292 = vmatprep.subr.mxu0 0.0
    %293 = vmatpush1.msra.mxu0 0.0
    %294 = vmatprep.subr.mxu0 0.0
    %295 = vmatpush1.msra.mxu0 0.0
    %296 = vmatprep.subr.mxu0 0.0
    %297 = vmatpush1.msra.mxu0 0.0
    %298 = vmatprep.subr.mxu0 0.0
    %299 = vmatpush1.msra.mxu0 0.0
    %300 = vmatprep.subr.mxu0 0.0
    %301 = vmatpush1.msra.mxu0 0.0
    %302 = vmatprep.subr.mxu0 0.0
    %303 = vmatpush1.msra.mxu0 0.0
    %304 = vmatprep.subr.mxu0 0.0
    %305 = vmatpush1.msra.mxu0 0.0
    %306 = vmatprep.subr.mxu0 0.0
    %307 = vmatpush1.msra.mxu0 0.0
    %308 = vmatprep.subr.mxu0 0.0
    %309 = vmatpush1.msra.mxu0 0.0
    %310 = vmatprep.subr.mxu0 0.0
    %311 = vmatpush1.msra.mxu0 0.0
    %312 = vmatprep.subr.mxu0 0.0
    %313 = vmatpush1.msra.mxu0 0.0
    %314 = vmatprep.subr.mxu0 0.0
    %315 = vmatpush1.msra.mxu0 0.0
    %316 = vmatprep.subr.mxu0 0.0
    %317 = vmatpush1.msra.mxu0 0.0
    %318 = vmatprep.subr.mxu0 0.0
    %319 = vmatpush1.msra.mxu0 0.0
    %320 = vmatprep.mubr.f32.mxu0 0.0
    %v321 = vand.u32 %v118, 4294901760
    %322 = vmatmul.mubr.f32.gmra.mrb[0].mxu0 %v321
    %v323 = vpop.f32.mrb[0].mxu0
    %v324 = vadd.f32 %v203, %v323
    %v325 = vpop.f32.mrb[0].mxu0
    %326 = vmatprep.mubr.f32.mxu0 0.0
    %v327 = vand.u32 %v121, 4294901760
    %328 = vmatmul.mubr.f32.gmra.mrb[0].mxu0 %v327
    %v329 = vpop.f32.mrb[0].mxu0
    %v330 = vadd.f32 %v213, %v329
    %v331 = vpop.f32.mrb[0].mxu0
    %332 = vdwg.mxu0
    %333 = vmatprep.subr.mxu0 0.0
    %v334 = vand.u32 %v76, 4294901760
    %v335 = vsub.f32 %v76, %v334
    %336 = vmatpush1.msra.mxu0 %v335
    %337 = vmatprep.subr.mxu0 0.0
    %v338 = vand.u32 %v77, 4294901760
    %v339 = vsub.f32 %v77, %v338
    %340 = vmatpush1.msra.mxu0 %v339
    %341 = vmatprep.subr.mxu0 0.0
    %v342 = vand.u32 %v78, 4294901760
    %v343 = vsub.f32 %v78, %v342
    %344 = vmatpush1.msra.mxu0 %v343
    %345 = vmatprep.subr.mxu0 0.0
    %v346 = vand.u32 %v79, 4294901760
    %v347 = vsub.f32 %v79, %v346
    %348 = vmatpush1.msra.mxu0 %v347
    %349 = vmatprep.subr.mxu0 0.0
    %v350 = vand.u32 %v80, 4294901760
    %v351 = vsub.f32 %v80, %v350
    %352 = vmatpush1.msra.mxu0 %v351
    %353 = vmatprep.subr.mxu0 0.0
    %v354 = vand.u32 %v81, 4294901760
    %v355 = vsub.f32 %v81, %v354
    %356 = vmatpush1.msra.mxu0 %v355
    %357 = vmatprep.subr.mxu0 0.0
    %v358 = vand.u32 %v82, 4294901760
    %v359 = vsub.f32 %v82, %v358
    %360 = vmatpush1.msra.mxu0 %v359
    %361 = vmatprep.subr.mxu0 0.0
    %v362 = vand.u32 %v83, 4294901760
    %v363 = vsub.f32 %v83, %v362
    %364 = vmatpush1.msra.mxu0 %v363
    %365 = vmatprep.subr.mxu0 0.0
    %366 = vmatpush1.msra.mxu0 0.0
    %367 = vmatprep.subr.mxu0 0.0
    %368 = vmatpush1.msra.mxu0 0.0
    %369 = vmatprep.subr.mxu0 0.0
    %370 = vmatpush1.msra.mxu0 0.0
    %371 = vmatprep.subr.mxu0 0.0
    %372 = vmatpush1.msra.mxu0 0.0
    %373 = vmatprep.subr.mxu0 0.0
    %374 = vmatpush1.msra.mxu0 0.0
    %375 = vmatprep.subr.mxu0 0.0
    %376 = vmatpush1.msra.mxu0 0.0
    %377 = vmatprep.subr.mxu0 0.0
    %378 = vmatpush1.msra.mxu0 0.0
    %379 = vmatprep.subr.mxu0 0.0
    %380 = vmatpush1.msra.mxu0 0.0
    %381 = vmatprep.subr.mxu0 0.0
    %382 = vmatpush1.msra.mxu0 0.0
    %383 = vmatprep.subr.mxu0 0.0
    %384 = vmatpush1.msra.mxu0 0.0
    %385 = vmatprep.subr.mxu0 0.0
    %386 = vmatpush1.msra.mxu0 0.0
    %387 = vmatprep.subr.mxu0 0.0
    %388 = vmatpush1.msra.mxu0 0.0
    %389 = vmatprep.subr.mxu0 0.0
    %390 = vmatpush1.msra.mxu0 0.0
    %391 = vmatprep.subr.mxu0 0.0
    %392 = vmatpush1.msra.mxu0 0.0
    %393 = vmatprep.subr.mxu0 0.0
    %394 = vmatpush1.msra.mxu0 0.0
    %395 = vmatprep.subr.mxu0 0.0
    %396 = vmatpush1.msra.mxu0 0.0
    %397 = vmatprep.subr.mxu0 0.0
    %398 = vmatpush1.msra.mxu0 0.0
    %399 = vmatprep.subr.mxu0 0.0
    %400 = vmatpush1.msra.mxu0 0.0
    %401 = vmatprep.subr.mxu0 0.0
    %402 = vmatpush1.msra.mxu0 0.0
    %403 = vmatprep.subr.mxu0 0.0
    %404 = vmatpush1.msra.mxu0 0.0
    %405 = vmatprep.subr.mxu0 0.0
    %406 = vmatpush1.msra.mxu0 0.0
    %407 = vmatprep.subr.mxu0 0.0
    %408 = vmatpush1.msra.mxu0 0.0
    %409 = vmatprep.subr.mxu0 0.0
    %410 = vmatpush1.msra.mxu0 0.0
    %411 = vmatprep.subr.mxu0 0.0
    %412 = vmatpush1.msra.mxu0 0.0
    %413 = vmatprep.mubr.f32.mxu0 0.0
    %v414 = vand.u32 %v118, 4294901760
    %v415 = vsub.f32 %v118, %v414
    %416 = vmatmul.mubr.f32.gmra.mrb[0].mxu0 %v415
    %v417 = vpop.f32.mrb[0].mxu0
    %v418 = vadd.f32 %v324, %v417
    %v419 = vpop.f32.mrb[0].mxu0
    %420 = vmatprep.mubr.f32.mxu0 0.0
    %v421 = vand.u32 %v121, 4294901760
    %v422 = vsub.f32 %v121, %v421
    %423 = vmatmul.mubr.f32.gmra.mrb[0].mxu0 %v422
    %v424 = vpop.f32.mrb[0].mxu0
    %v425 = vadd.f32 %v330, %v424
    %v426 = vpop.f32.mrb[0].mxu0
    %427 = vdwg.mxu0
    %428 = vmatprep.subr.mxu0 0.0
    %v429 = vand.u32 %v76, 4294901760
    %430 = vmatpush1.msra.mxu0 %v429
    %431 = vmatprep.subr.mxu0 0.0
    %v432 = vand.u32 %v77, 4294901760
    %433 = vmatpush1.msra.mxu0 %v432
    %434 = vmatprep.subr.mxu0 0.0
    %v435 = vand.u32 %v78, 4294901760
    %436 = vmatpush1.msra.mxu0 %v435
    %437 = vmatprep.subr.mxu0 0.0
    %v438 = vand.u32 %v79, 4294901760
    %439 = vmatpush1.msra.mxu0 %v438
    %440 = vmatprep.subr.mxu0 0.0
    %v441 = vand.u32 %v80, 4294901760
    %442 = vmatpush1.msra.mxu0 %v441
    %443 = vmatprep.subr.mxu0 0.0
    %v444 = vand.u32 %v81, 4294901760
    %445 = vmatpush1.msra.mxu0 %v444
    %446 = vmatprep.subr.mxu0 0.0
    %v447 = vand.u32 %v82, 4294901760
    %448 = vmatpush1.msra.mxu0 %v447
    %449 = vmatprep.subr.mxu0 0.0
    %v450 = vand.u32 %v83, 4294901760
    %451 = vmatpush1.msra.mxu0 %v450
    %452 = vmatprep.subr.mxu0 0.0
    %453 = vmatpush1.msra.mxu0 0.0
    %454 = vmatprep.subr.mxu0 0.0
    %455 = vmatpush1.msra.mxu0 0.0
    %456 = vmatprep.subr.mxu0 0.0
    %457 = vmatpush1.msra.mxu0 0.0
    %458 = vmatprep.subr.mxu0 0.0
    %459 = vmatpush1.msra.mxu0 0.0
    %460 = vmatprep.subr.mxu0 0.0
    %461 = vmatpush1.msra.mxu0 0.0
    %462 = vmatprep.subr.mxu0 0.0
    %463 = vmatpush1.msra.mxu0 0.0
    %464 = vmatprep.subr.mxu0 0.0
    %465 = vmatpush1.msra.mxu0 0.0
    %466 = vmatprep.subr.mxu0 0.0
    %467 = vmatpush1.msra.mxu0 0.0
    %468 = vmatprep.subr.mxu0 0.0
    %469 = vmatpush1.msra.mxu0 0.0
    %470 = vmatprep.subr.mxu0 0.0
    %471 = vmatpush1.msra.mxu0 0.0
    %472 = vmatprep.subr.mxu0 0.0
    %473 = vmatpush1.msra.mxu0 0.0
    %474 = vmatprep.subr.mxu0 0.0
    %475 = vmatpush1.msra.mxu0 0.0
    %476 = vmatprep.subr.mxu0 0.0
    %477 = vmatpush1.msra.mxu0 0.0
    %478 = vmatprep.subr.mxu0 0.0
    %479 = vmatpush1.msra.mxu0 0.0
    %480 = vmatprep.subr.mxu0 0.0
    %481 = vmatpush1.msra.mxu0 0.0
    %482 = vmatprep.subr.mxu0 0.0
    %483 = vmatpush1.msra.mxu0 0.0
    %484 = vmatprep.subr.mxu0 0.0
    %485 = vmatpush1.msra.mxu0 0.0
    %486 = vmatprep.subr.mxu0 0.0
    %487 = vmatpush1.msra.mxu0 0.0
    %488 = vmatprep.subr.mxu0 0.0
    %489 = vmatpush1.msra.mxu0 0.0
    %490 = vmatprep.subr.mxu0 0.0
    %491 = vmatpush1.msra.mxu0 0.0
    %492 = vmatprep.subr.mxu0 0.0
    %493 = vmatpush1.msra.mxu0 0.0
    %494 = vmatprep.subr.mxu0 0.0
    %495 = vmatpush1.msra.mxu0 0.0
    %496 = vmatprep.subr.mxu0 0.0
    %497 = vmatpush1.msra.mxu0 0.0
    %498 = vmatprep.subr.mxu0 0.0
    %499 = vmatpush1.msra.mxu0 0.0
    %500 = vmatprep.mubr.f32.mxu0 0.0
    %v501 = vand.u32 %v118, 4294901760
    %v502 = vsub.f32 %v118, %v501
    %v503 = vand.u32 %v502, 4294901760
    %504 = vmatmul.mubr.f32.gmra.mrb[0].mxu0 %v503
    %v505 = vpop.f32.mrb[0].mxu0
    %v506 = vadd.f32 %v418, %v505
    %v507 = vpop.f32.mrb[0].mxu0
    %508 = vmatprep.mubr.f32.mxu0 0.0
    %v509 = vand.u32 %v121, 4294901760
    %v510 = vsub.f32 %v121, %v509
    %v511 = vand.u32 %v510, 4294901760
    %512 = vmatmul.mubr.f32.gmra.mrb[0].mxu0 %v511
    %v513 = vpop.f32.mrb[0].mxu0
    %v514 = vadd.f32 %v425, %v513
    %v515 = vpop.f32.mrb[0].mxu0
    %516 = vdwg.mxu0
    %517 = vmatprep.subr.mxu0 0.0
    %v518 = vand.u32 %v76, 4294901760
    %v519 = vsub.f32 %v76, %v518
    %v520 = vand.u32 %v519, 4294901760
    %521 = vmatpush1.msra.mxu0 %v520
    %522 = vmatprep.subr.mxu0 0.0
    %v523 = vand.u32 %v77, 4294901760
    %v524 = vsub.f32 %v77, %v523
    %v525 = vand.u32 %v524, 4294901760
    %526 = vmatpush1.msra.mxu0 %v525
    %527 = vmatprep.subr.mxu0 0.0
    %v528 = vand.u32 %v78, 4294901760
    %v529 = vsub.f32 %v78, %v528
    %v530 = vand.u32 %v529, 4294901760
    %531 = vmatpush1.msra.mxu0 %v530
    %532 = vmatprep.subr.mxu0 0.0
    %v533 = vand.u32 %v79, 4294901760
    %v534 = vsub.f32 %v79, %v533
    %v535 = vand.u32 %v534, 4294901760
    %536 = vmatpush1.msra.mxu0 %v535
    %537 = vmatprep.subr.mxu0 0.0
    %v538 = vand.u32 %v80, 4294901760
    %v539 = vsub.f32 %v80, %v538
    %v540 = vand.u32 %v539, 4294901760
    %541 = vmatpush1.msra.mxu0 %v540
    %542 = vmatprep.subr.mxu0 0.0
    %v543 = vand.u32 %v81, 4294901760
    %v544 = vsub.f32 %v81, %v543
    %v545 = vand.u32 %v544, 4294901760
    %546 = vmatpush1.msra.mxu0 %v545
    %547 = vmatprep.subr.mxu0 0.0
    %v548 = vand.u32 %v82, 4294901760
    %v549 = vsub.f32 %v82, %v548
    %v550 = vand.u32 %v549, 4294901760
    %551 = vmatpush1.msra.mxu0 %v550
    %552 = vmatprep.subr.mxu0 0.0
    %v553 = vand.u32 %v83, 4294901760
    %v554 = vsub.f32 %v83, %v553
    %v555 = vand.u32 %v554, 4294901760
    %556 = vmatpush1.msra.mxu0 %v555
    %557 = vmatprep.subr.mxu0 0.0
    %558 = vmatpush1.msra.mxu0 0.0
    %559 = vmatprep.subr.mxu0 0.0
    %560 = vmatpush1.msra.mxu0 0.0
    %561 = vmatprep.subr.mxu0 0.0
    %562 = vmatpush1.msra.mxu0 0.0
    %563 = vmatprep.subr.mxu0 0.0
    %564 = vmatpush1.msra.mxu0 0.0
    %565 = vmatprep.subr.mxu0 0.0
    %566 = vmatpush1.msra.mxu0 0.0
    %567 = vmatprep.subr.mxu0 0.0
    %568 = vmatpush1.msra.mxu0 0.0
    %569 = vmatprep.subr.mxu0 0.0
    %570 = vmatpush1.msra.mxu0 0.0
    %571 = vmatprep.subr.mxu0 0.0
    %572 = vmatpush1.msra.mxu0 0.0
    %573 = vmatprep.subr.mxu0 0.0
    %574 = vmatpush1.msra.mxu0 0.0
    %575 = vmatprep.subr.mxu0 0.0
    %576 = vmatpush1.msra.mxu0 0.0
    %577 = vmatprep.subr.mxu0 0.0
    %578 = vmatpush1.msra.mxu0 0.0
    %579 = vmatprep.subr.mxu0 0.0
    %580 = vmatpush1.msra.mxu0 0.0
    %581 = vmatprep.subr.mxu0 0.0
    %582 = vmatpush1.msra.mxu0 0.0
    %583 = vmatprep.subr.mxu0 0.0
    %584 = vmatpush1.msra.mxu0 0.0
    %585 = vmatprep.subr.mxu0 0.0
    %586 = vmatpush1.msra.mxu0 0.0
    %587 = vmatprep.subr.mxu0 0.0
    %588 = vmatpush1.msra.mxu0 0.0
    %589 = vmatprep.subr.mxu0 0.0
    %590 = vmatpush1.msra.mxu0 0.0
    %591 = vmatprep.subr.mxu0 0.0
    %592 = vmatpush1.msra.mxu0 0.0
    %593 = vmatprep.subr.mxu0 0.0
    %594 = vmatpush1.msra.mxu0 0.0
    %595 = vmatprep.subr.mxu0 0.0
    %596 = vmatpush1.msra.mxu0 0.0
    %597 = vmatprep.subr.mxu0 0.0
    %598 = vmatpush1.msra.mxu0 0.0
    %599 = vmatprep.subr.mxu0 0.0
    %600 = vmatpush1.msra.mxu0 0.0
    %601 = vmatprep.subr.mxu0 0.0
    %602 = vmatpush1.msra.mxu0 0.0
    %603 = vmatprep.subr.mxu0 0.0
    %604 = vmatpush1.msra.mxu0 0.0
    %605 = vmatprep.mubr.f32.mxu0 0.0
    %v606 = vand.u32 %v118, 4294901760
    %607 = vmatmul.mubr.f32.gmra.mrb[0].mxu0 %v606
    %v608 = vpop.f32.mrb[0].mxu0
    %v609 = vadd.f32 %v506, %v608
    %v610 = vpop.f32.mrb[0].mxu0
    %611 = vmatprep.mubr.f32.mxu0 0.0
    %v612 = vand.u32 %v121, 4294901760
    %613 = vmatmul.mubr.f32.gmra.mrb[0].mxu0 %v612
    %v614 = vpop.f32.mrb[0].mxu0
    %v615 = vadd.f32 %v514, %v614
    %v616 = vpop.f32.mrb[0].mxu0
    %617 = vdwg.mxu0
    %618 = vmatprep.subr.mxu0 0.0
    %v619 = vand.u32 %v76, 4294901760
    %620 = vmatpush1.msra.mxu0 %v619
    %621 = vmatprep.subr.mxu0 0.0
    %v622 = vand.u32 %v77, 4294901760
    %623 = vmatpush1.msra.mxu0 %v622
    %624 = vmatprep.subr.mxu0 0.0
    %v625 = vand.u32 %v78, 4294901760
    %626 = vmatpush1.msra.mxu0 %v625
    %627 = vmatprep.subr.mxu0 0.0
    %v628 = vand.u32 %v79, 4294901760
    %629 = vmatpush1.msra.mxu0 %v628
    %630 = vmatprep.subr.mxu0 0.0
    %v631 = vand.u32 %v80, 4294901760
    %632 = vmatpush1.msra.mxu0 %v631
    %633 = vmatprep.subr.mxu0 0.0
    %v634 = vand.u32 %v81, 4294901760
    %635 = vmatpush1.msra.mxu0 %v634
    %636 = vmatprep.subr.mxu0 0.0
    %v637 = vand.u32 %v82, 4294901760
    %638 = vmatpush1.msra.mxu0 %v637
    %639 = vmatprep.subr.mxu0 0.0
    %v640 = vand.u32 %v83, 4294901760
    %641 = vmatpush1.msra.mxu0 %v640
    %642 = vmatprep.subr.mxu0 0.0
    %643 = vmatpush1.msra.mxu0 0.0
    %644 = vmatprep.subr.mxu0 0.0
    %645 = vmatpush1.msra.mxu0 0.0
    %646 = vmatprep.subr.mxu0 0.0
    %647 = vmatpush1.msra.mxu0 0.0
    %648 = vmatprep.subr.mxu0 0.0
    %649 = vmatpush1.msra.mxu0 0.0
    %650 = vmatprep.subr.mxu0 0.0
    %651 = vmatpush1.msra.mxu0 0.0
    %652 = vmatprep.subr.mxu0 0.0
    %653 = vmatpush1.msra.mxu0 0.0
    %654 = vmatprep.subr.mxu0 0.0
    %655 = vmatpush1.msra.mxu0 0.0
    %656 = vmatprep.subr.mxu0 0.0
    %657 = vmatpush1.msra.mxu0 0.0
    %658 = vmatprep.subr.mxu0 0.0
    %659 = vmatpush1.msra.mxu0 0.0
    %660 = vmatprep.subr.mxu0 0.0
    %661 = vmatpush1.msra.mxu0 0.0
    %662 = vmatprep.subr.mxu0 0.0
    %663 = vmatpush1.msra.mxu0 0.0
    %664 = vmatprep.subr.mxu0 0.0
    %665 = vmatpush1.msra.mxu0 0.0
    %666 = vmatprep.subr.mxu0 0.0
    %667 = vmatpush1.msra.mxu0 0.0
    %668 = vmatprep.subr.mxu0 0.0
    %669 = vmatpush1.msra.mxu0 0.0
    %670 = vmatprep.subr.mxu0 0.0
    %671 = vmatpush1.msra.mxu0 0.0
    %672 = vmatprep.subr.mxu0 0.0
    %673 = vmatpush1.msra.mxu0 0.0
    %674 = vmatprep.subr.mxu0 0.0
    %675 = vmatpush1.msra.mxu0 0.0
    %676 = vmatprep.subr.mxu0 0.0
    %677 = vmatpush1.msra.mxu0 0.0
    %678 = vmatprep.subr.mxu0 0.0
    %679 = vmatpush1.msra.mxu0 0.0
    %680 = vmatprep.subr.mxu0 0.0
    %681 = vmatpush1.msra.mxu0 0.0
    %682 = vmatprep.subr.mxu0 0.0
    %683 = vmatpush1.msra.mxu0 0.0
    %684 = vmatprep.subr.mxu0 0.0
    %685 = vmatpush1.msra.mxu0 0.0
    %686 = vmatprep.subr.mxu0 0.0
    %687 = vmatpush1.msra.mxu0 0.0
    %688 = vmatprep.subr.mxu0 0.0
    %689 = vmatpush1.msra.mxu0 0.0
    %690 = vmatprep.mubr.f32.mxu0 0.0
    %v691 = vand.u32 %v118, 4294901760
    %692 = vmatmul.mubr.f32.gmra.mrb[0].mxu0 %v691
    %v693 = vpop.f32.mrb[0].mxu0
    %v694 = vadd.f32 %v609, %v693
    %v695 = vpop.f32.mrb[0].mxu0
    %696 = vmatprep.mubr.f32.mxu0 0.0
    %v697 = vand.u32 %v121, 4294901760
    %698 = vmatmul.mubr.f32.gmra.mrb[0].mxu0 %v697
    %v699 = vpop.f32.mrb[0].mxu0
    %v700 = vadd.f32 %v615, %v699
    %v701 = vpop.f32.mrb[0].mxu0
    %702 = vdwg.mxu0
    %703 = vst [vmem:[#allocation7] sm:$0xff] %v694
    %704 = vst [vmem:[#allocation7 + $0x8] sm:$0xff] %v700
    // Predicated region
    $region18: #{tpu_custom_call.1} parent=1 // pred_check
      _
    $region19: #{tpu_custom_call.1} parent=1 // pred_check_branch
      %706 = sbr.rel (0) target = $region21
    $region20: #{tpu_custom_call.1} parent=1 // pred_region
      %s708 = ssub.s32 256, 256
      %709 = vsyncadd [#allocation4], %s708
      %s710 = sshll.u32 [#allocation7], 4
      %s711 = int_to_ptr.vmem [resolvable:$true] %s710
      %716 = dma.vmem_to_hbm [thread:$0]  %s711, 256, %s2, [#allocation4], 128, 128, 8
    $region21: #{tpu_custom_call.1} parent=1 // pred_fallthru
      _
    // Predicated region
    $region22: #{tpu_custom_call.1} parent=1 // pred_check
      _
    $region23: #{tpu_custom_call.1} parent=1 // pred_check_branch
      %718 = sbr.rel (0) target = $region25
    $region24: #{tpu_custom_call.1} parent=1 // pred_region
      %719 = dma.done [#allocation4], 256
    $region25: #{tpu_custom_call.1} parent=1 // pred_fallthru
      _
    %720 = vsyncpa [#allocation3], 1
    %721 = vsyncpa [#allocation6], 1
    %722 = vsyncpa [#allocation4], 1

</llo_original>
